<compile_context>
chip_gen: v6e
topology: v6e:2x2x1
jax: 0.10.0
libtpu: 0.0.40
codegen_flags: <defaults>
</compile_context>

<pallas_src>
import numpy as np
import jax
import jax.numpy as jnp
from jax.experimental import pallas as pl
from jax.experimental.pallas import tpu as pltpu

_LANE = 128
_SUBLANE = 8


def _round_up(x, m):
    return (x + m - 1) // m * m


def fused_net_kernel(ids_ref, table_ref, w1_ref, b1_ref, w2_ref, b2_ref, out_ref):
    """Embedding gather (as one-hot matmul) + mean-pool + fc1/ReLU + fc2, fully fused.

    ids_ref:   (TB, T)        int32   token ids for this batch tile
    table_ref: (V_pad, E_pad) f32     frozen embedding table (zero-padded)
    w1_ref:    (E_pad, H_pad) f32     fc1.weight.T pre-scaled by 1/T (mean folded in)
    b1_ref:    (1, H_pad)     f32     fc1.bias
    w2_ref:    (H_pad, O_pad) f32     fc2.weight.T
    b2_ref:    (1, O_pad)     f32     fc2.bias
    out_ref:   (TB, O_pad)    f32     logits (padded, lane-dense)
    """
    ids = ids_ref[...]                                                     # (TB, T)
    tb, t = ids.shape
    v = table_ref.shape[0]

    # Token-count matrix: counts[b, v] = #{t : ids[b, t] == v}.  Turns the embedding
    # gather + sum over the sequence axis into a single MXU matmul against the table.
    vocab_iota = jax.lax.broadcasted_iota(jnp.int32, (tb, t, v), 2)        # (TB, T, V)
    onehot = (ids[:, :, None] == vocab_iota).astype(jnp.float32)          # (TB, T, V)
    counts = jnp.sum(onehot, axis=1)                                       # (TB, V)

    # sum_t emb[ids[b, t], :] == counts @ table ; the 1/T of the mean is folded into w1.
    pooled_sum = jnp.dot(counts, table_ref[...],
                         preferred_element_type=jnp.float32)               # (TB, E)

    # fc1 + ReLU (MXU matmul with f32 accumulation; bias/ReLU on the VPU).
    h = jnp.dot(pooled_sum, w1_ref[...],
                preferred_element_type=jnp.float32) + b1_ref[...]          # (TB, H)
    h = jnp.maximum(h, 0.0)

    # fc2 straight into the lane-dense output tile.
    out_ref[...] = jnp.dot(h, w2_ref[...],
                           preferred_element_type=jnp.float32) + b2_ref[...]


def net_forward(x_ids, embeddings, w1, b1, w2, b2):
    """Forward pass of Net: embedding lookup -> mean over seq -> fc1+ReLU -> fc2."""
    B, T = x_ids.shape
    V, E = embeddings.shape
    H = w1.shape[0]
    O = w2.shape[0]

    # Lane/sublane-dense padded sizes.
    V_pad = _round_up(V, _LANE)
    E_pad = _round_up(E, _LANE)
    H_pad = _round_up(H, _LANE)
    O_pad = _round_up(O, _LANE)
    B_pad = _round_up(B, _SUBLANE)
    if B_pad > _LANE:
        B_pad = _round_up(B, _LANE)
    TB = min(B_pad, _LANE)                       # batch tile: one grid step per TB rows

    f32 = jnp.float32
    # Padded operands (weights pre-transposed once; mean's 1/T folded into w1).
    ids_p = jnp.zeros((B_pad, T), jnp.int32).at[:B, :].set(x_ids.astype(jnp.int32))
    table_p = jnp.zeros((V_pad, E_pad), f32).at[:V, :E].set(embeddings.astype(f32))
    w1s_p = jnp.zeros((E_pad, H_pad), f32).at[:E, :H].set((w1.T / T).astype(f32))
    b1_p = jnp.zeros((1, H_pad), f32).at[0, :H].set(b1.astype(f32))
    w2t_p = jnp.zeros((H_pad, O_pad), f32).at[:H, :O].set(w2.T.astype(f32))
    b2_p = jnp.zeros((1, O_pad), f32).at[0, :O].set(b2.astype(f32))

    out_pad = pl.pallas_call(
        fused_net_kernel,
        out_shape=jax.ShapeDtypeStruct((B_pad, O_pad), f32),
        grid=(B_pad // TB,),
        in_specs=[
            pl.BlockSpec((TB, T), lambda i: (i, 0)),            # ids: tiled over batch
            pl.BlockSpec((V_pad, E_pad), lambda i: (0, 0)),     # embedding table: resident
            pl.BlockSpec((E_pad, H_pad), lambda i: (0, 0)),     # w1 (1/T folded in)
            pl.BlockSpec((1, H_pad), lambda i: (0, 0)),         # b1
            pl.BlockSpec((H_pad, O_pad), lambda i: (0, 0)),     # w2
            pl.BlockSpec((1, O_pad), lambda i: (0, 0)),         # b2
        ],
        out_specs=pl.BlockSpec((TB, O_pad), lambda i: (i, 0)),  # lane-dense output tile
        compiler_params=pltpu.CompilerParams(
            dimension_semantics=("parallel",)),                 # shard batch grid over TCs
    )(ids_p, table_p, w1s_p, b1_p, w2t_p, b2_p)

    return out_pad[:B, :O]


def reference_forward(x_ids, embeddings, w1, b1, w2, b2):
    """Pure-JAX reference matching the PyTorch Net.forward semantics."""
    emb = jnp.take(embeddings, x_ids, axis=0)                              # (B, T, E)
    pooled = jnp.mean(emb, axis=1)                                         # (B, E)
    h = jax.nn.relu(pooled @ w1.T + b1)                                    # (B, H)
    return h @ w2.T + b2                                                   # (B, O)


if __name__ == "__main__":
    # Small shapes consistent with the module's forward.
    vocab_size, embed_dim, hidden_dim, output_size = 100, 32, 32, 4
    batch, seq = 2, 8

    key = jax.random.PRNGKey(0)
    k_emb, k_ids, k_w1, k_b1, k_w2, k_b2 = jax.random.split(key, 6)

    embeddings = jax.random.normal(k_emb, (vocab_size, embed_dim), jnp.float32)
    x_ids = jax.random.randint(k_ids, (batch, seq), 0, vocab_size, jnp.int32)

    # Deterministic synthetic parameters (shapes follow nn.Linear conventions).
    w1 = 0.1 * jax.random.normal(k_w1, (hidden_dim, embed_dim), jnp.float32)    # fc1.weight
    b1 = 0.1 * jax.random.normal(k_b1, (hidden_dim,), jnp.float32)              # fc1.bias
    w2 = 0.1 * jax.random.normal(k_w2, (output_size, hidden_dim), jnp.float32)  # fc2.weight
    b2 = 0.1 * jax.random.normal(k_b2, (output_size,), jnp.float32)             # fc2.bias

    out = net_forward(x_ids, embeddings, w1, b1, w2, b2)
    out = jax.block_until_ready(out)

    ref = reference_forward(x_ids, embeddings, w1, b1, w2, b2)
    ref = jax.block_until_ready(ref)

    assert out.shape == (batch, output_size)
    assert np.allclose(np.asarray(out), np.asarray(ref), atol=1e-4, rtol=1e-4)
    print("KERNEL_OK")
</pallas_src>

<mosaic_0001>
module attributes {stable_mosaic.version = 11 : i64} {
  func.func @fused_net_kernel(%arg0: i32, %arg1: memref<8x8xi32, #tpu.memory_space<vmem>>, %arg2: memref<128x128xf32, #tpu.memory_space<vmem>>, %arg3: memref<128x128xf32, #tpu.memory_space<vmem>>, %arg4: memref<1x128xf32, #tpu.memory_space<vmem>>, %arg5: memref<128x128xf32, #tpu.memory_space<vmem>>, %arg6: memref<1x128xf32, #tpu.memory_space<vmem>>, %arg7: memref<8x128xf32, #tpu.memory_space<vmem>>) attributes {dimension_semantics = [#tpu.dimension_semantics<parallel>], iteration_bounds = array<i64: 1>, scalar_prefetch = 0 : i64, scratch_operands = 0 : i64, tpu.core_type = #tpu.core_type<tc>, window_params = [{transform_indices = @transform_0, window_bounds = array<i64: 8, 8>}, {pipeline_mode = #tpu.pipeline_mode<synchronous>, transform_indices = @transform_1, window_bounds = array<i64: 128, 128>}, {pipeline_mode = #tpu.pipeline_mode<synchronous>, transform_indices = @transform_2, window_bounds = array<i64: 128, 128>}, {pipeline_mode = #tpu.pipeline_mode<synchronous>, transform_indices = @transform_3, window_bounds = array<i64: 1, 128>}, {pipeline_mode = #tpu.pipeline_mode<synchronous>, transform_indices = @transform_4, window_bounds = array<i64: 128, 128>}, {pipeline_mode = #tpu.pipeline_mode<synchronous>, transform_indices = @transform_5, window_bounds = array<i64: 1, 128>}, {transform_indices = @transform_6, window_bounds = array<i64: 8, 128>}]} {
    %c0 = arith.constant 0 : index
    %c0_0 = arith.constant 0 : index
    %0 = vector.load %arg1[%c0, %c0_0] : memref<8x8xi32, #tpu.memory_space<vmem>>, vector<8x8xi32>
    %1 = tpu.iota {dimensions = array<i32: 2>} : vector<8x8x128xi32>
    %2 = vector.shape_cast %0 : vector<8x8xi32> to vector<8x8x1xi32>
    %3 = vector.broadcast %2 : vector<8x8x1xi32> to vector<8x8x128xi32>
    %4 = arith.cmpi eq, %3, %1 : vector<8x8x128xi32>
    %5 = arith.extui %4 : vector<8x8x128xi1> to vector<8x8x128xi32>
    %6 = arith.sitofp %5 : vector<8x8x128xi32> to vector<8x8x128xf32>
    %cst = arith.constant dense<0.000000e+00> : vector<8x128xf32>
    %7 = vector.multi_reduction <add>, %6, %cst [1] : vector<8x8x128xf32> to vector<8x128xf32>
    %c0_1 = arith.constant 0 : index
    %c0_2 = arith.constant 0 : index
    %8 = vector.load %arg2[%c0_1, %c0_2] : memref<128x128xf32, #tpu.memory_space<vmem>>, vector<128x128xf32>
    %cst_3 = arith.constant dense<0.000000e+00> : vector<8x128xf32>
    %9 = tpu.matmul %7, %8, %cst_3 {dimension_numbers = #tpu.dot_dimension_numbers<[1], [0], [0], [1], [0, 0, 1, 1], [], []>} : vector<8x128xf32>, vector<128x128xf32>, vector<8x128xf32> -> vector<8x128xf32>
    %c0_4 = arith.constant 0 : index
    %c0_5 = arith.constant 0 : index
    %10 = vector.load %arg3[%c0_4, %c0_5] : memref<128x128xf32, #tpu.memory_space<vmem>>, vector<128x128xf32>
    %cst_6 = arith.constant dense<0.000000e+00> : vector<8x128xf32>
    %11 = tpu.matmul %9, %10, %cst_6 {dimension_numbers = #tpu.dot_dimension_numbers<[1], [0], [0], [1], [0, 0, 1, 1], [], []>} : vector<8x128xf32>, vector<128x128xf32>, vector<8x128xf32> -> vector<8x128xf32>
    %c0_7 = arith.constant 0 : index
    %c0_8 = arith.constant 0 : index
    %12 = vector.load %arg4[%c0_7, %c0_8] : memref<1x128xf32, #tpu.memory_space<vmem>>, vector<1x128xf32>
    %13 = vector.broadcast %12 : vector<1x128xf32> to vector<8x128xf32>
    %14 = arith.addf %11, %13 : vector<8x128xf32>
    %cst_9 = arith.constant 0.000000e+00 : f32
    %15 = vector.broadcast %cst_9 : f32 to vector<8x128xf32>
    %16 = arith.maximumf %14, %15 : vector<8x128xf32>
    %c0_10 = arith.constant 0 : index
    %c0_11 = arith.constant 0 : index
    %17 = vector.load %arg5[%c0_10, %c0_11] : memref<128x128xf32, #tpu.memory_space<vmem>>, vector<128x128xf32>
    %cst_12 = arith.constant dense<0.000000e+00> : vector<8x128xf32>
    %18 = tpu.matmul %16, %17, %cst_12 {dimension_numbers = #tpu.dot_dimension_numbers<[1], [0], [0], [1], [0, 0, 1, 1], [], []>} : vector<8x128xf32>, vector<128x128xf32>, vector<8x128xf32> -> vector<8x128xf32>
    %c0_13 = arith.constant 0 : index
    %c0_14 = arith.constant 0 : index
    %19 = vector.load %arg6[%c0_13, %c0_14] : memref<1x128xf32, #tpu.memory_space<vmem>>, vector<1x128xf32>
    %20 = vector.broadcast %19 : vector<1x128xf32> to vector<8x128xf32>
    %21 = arith.addf %18, %20 : vector<8x128xf32>
    %c0_15 = arith.constant 0 : index
    %c0_16 = arith.constant 0 : index
    %22 = vector.load %arg7[%c0_15, %c0_16] : memref<8x128xf32, #tpu.memory_space<vmem>>, vector<8x128xf32>
    tpu.vector_store %arg7[%c0_15, %c0_16], %21 {strides = array<i32>} : memref<8x128xf32, #tpu.memory_space<vmem>>, vector<8x128xf32>,
    return
  }
  func.func @transform_0(%arg0: i32) -> (i32, i32) {
    %c0_i32 = arith.constant 0 : i32
    %c0_i32_0 = arith.constant 0 : i32
    return %arg0, %c0_i32 : i32, i32
  }
  func.func @transform_1(%arg0: i32) -> (i32, i32) {
    %c0_i32 = arith.constant 0 : i32
    %c0_i32_0 = arith.constant 0 : i32
    %c0_i32_1 = arith.constant 0 : i32
    return %c0_i32, %c0_i32_0 : i32, i32
  }
  func.func @transform_2(%arg0: i32) -> (i32, i32) {
    %c0_i32 = arith.constant 0 : i32
    %c0_i32_0 = arith.constant 0 : i32
    %c0_i32_1 = arith.constant 0 : i32
    return %c0_i32, %c0_i32_0 : i32, i32
  }
  func.func @transform_3(%arg0: i32) -> (i32, i32) {
    %c0_i32 = arith.constant 0 : i32
    %c0_i32_0 = arith.constant 0 : i32
    %c0_i32_1 = arith.constant 0 : i32
    return %c0_i32, %c0_i32_0 : i32, i32
  }
  func.func @transform_4(%arg0: i32) -> (i32, i32) {
    %c0_i32 = arith.constant 0 : i32
    %c0_i32_0 = arith.constant 0 : i32
    %c0_i32_1 = arith.constant 0 : i32
    return %c0_i32, %c0_i32_0 : i32, i32
  }
  func.func @transform_5(%arg0: i32) -> (i32, i32) {
    %c0_i32 = arith.constant 0 : i32
    %c0_i32_0 = arith.constant 0 : i32
    %c0_i32_1 = arith.constant 0 : i32
    return %c0_i32, %c0_i32_0 : i32, i32
  }
  func.func @transform_6(%arg0: i32) -> (i32, i32) {
    %c0_i32 = arith.constant 0 : i32
    %c0_i32_0 = arith.constant 0 : i32
    return %arg0, %c0_i32 : i32, i32
  }
}

</mosaic_0001>

<llo_original>
// kernel: tpu_custom_call.1
$region0: #{tpu_custom_call.1}
  #allocation0 [shape = 'u32[]', space=smem, size = 0x4, offset = 0x4, fixed_abs, tag = 'smem constant byte address 0x4 - core index']
  #allocation1 [shape = 'u32[144,128]{1,0:T(1,128)}', space=vmem, size = 0x12000, scoped, tag = 'internal scratch']
  %s0 = inlined_call_operand.hbm [shape: s32[8,8], index: 0, kind: input, shape index: {}]
  %s1 = inlined_call_operand.hbm [shape: f32[128,128], index: 1, kind: input, shape index: {}]
  %s2 = inlined_call_operand.hbm [shape: f32[128,128], index: 2, kind: input, shape index: {}]
  %s3 = inlined_call_operand.vmem [shape: f32[1,128], index: 3, kind: input, shape index: {}]
  %s4 = inlined_call_operand.hbm [shape: f32[128,128], index: 4, kind: input, shape index: {}]
  %s5 = inlined_call_operand.vmem [shape: f32[1,128], index: 5, kind: input, shape index: {}]
  %s6 = inlined_call_operand.hbm [shape: f32[8,128], index: 6, kind: output, shape index: {}]
  %s7 = sld [smem:[#allocation0]]
  $region50: #{tpu_custom_call.1} parent=0
    _
  %s9 = ssub.s32 1, %s7
  %s10 = scalar_select 0, %s9, %s7
  $region1: #{tpu_custom_call.1} parent=0
    #allocation2 [shape = 'u8[4096]{0}', space=vmem, size = 0x1000, scoped, tag = 'input window, operand 0, single buffered']
    #allocation3 [shape = 's32[1]{0}', space=sflag, size = 0x4, scoped, tag = 'scoped memory for tpu_custom_call.1']
    #allocation4 [shape = 's32[1]{0}', space=sflag, size = 0x4, scoped, tag = 'scoped memory for tpu_custom_call.1']
    #allocation5 [shape = 'u8[65536]{0}', space=vmem, size = 0x10000, scoped, tag = 'input window, operand 1, single buffered']
    #allocation6 [shape = 's32[1]{0}', space=sflag, size = 0x4, scoped, tag = 'scoped memory for tpu_custom_call.1']
    #allocation7 [shape = 'u8[65536]{0}', space=vmem, size = 0x10000, scoped, tag = 'input window, operand 2, single buffered']
    #allocation8 [shape = 'u8[65536]{0}', space=vmem, size = 0x10000, scoped, tag = 'input window, operand 4, single buffered']
    #allocation9 [shape = 's32[1]{0}', space=sflag, size = 0x4, scoped, tag = 'scoped memory for tpu_custom_call.1']
    #allocation10 [shape = 'u8[4096]{0}', space=vmem, size = 0x1000, scoped, tag = 'output window, operand 0, single buffered']
    %11 = vsyncpa [#allocation3], 0
    %12 = vsyncpa [#allocation6], 0
    %13 = vsyncpa [#allocation9], 0
    %14 = vsyncpa [#allocation4], 0
    // Predicated region
    $region2: #{tpu_custom_call.1} parent=1 // pred_check
      _
    $region3: #{tpu_custom_call.1} parent=1 // pred_check_branch
      %16 = sbr.rel (0) target = $region5
    $region4: #{tpu_custom_call.1} parent=1 // pred_region
      %s18 = ssub.s32 128, 128
      %19 = vsyncadd [#allocation3], %s18
      %s21 = sshll.u32 [#allocation2], 4
      %s22 = int_to_ptr.vmem [resolvable:$true] %s21
      %24 = dma.hbm_to_vmem [thread:$0]  %s0, 128, %s22, [#allocation3]
    $region5: #{tpu_custom_call.1} parent=1 // pred_fallthru
      _
    // Predicated region
    $region6: #{tpu_custom_call.1} parent=1 // pred_check
      _
    $region7: #{tpu_custom_call.1} parent=1 // pred_check_branch
      %26 = sbr.rel (0) target = $region9
    $region8: #{tpu_custom_call.1} parent=1 // pred_region
      %s28 = ssub.s32 2048, 2048
      %29 = vsyncadd [#allocation6], %s28
      %s30 = sshll.u32 [#allocation5], 4
      %s31 = int_to_ptr.vmem [resolvable:$true] %s30
      %36 = dma.hbm_to_vmem [thread:$0]  %s1, 2048, %s31, [#allocation6], 128, 128, 8
    $region9: #{tpu_custom_call.1} parent=1 // pred_fallthru
      _
    // Predicated region
    $region10: #{tpu_custom_call.1} parent=1 // pred_check
      _
    $region11: #{tpu_custom_call.1} parent=1 // pred_check_branch
      %38 = sbr.rel (0) target = $region13
    $region12: #{tpu_custom_call.1} parent=1 // pred_region
      %s40 = ssub.s32 2048, 2048
      %41 = vsyncadd [#allocation6], %s40
      %s42 = sshll.u32 [#allocation7], 4
      %s43 = int_to_ptr.vmem [resolvable:$true] %s42
      %48 = dma.hbm_to_vmem [thread:$0]  %s2, 2048, %s43, [#allocation6], 128, 128, 8
    $region13: #{tpu_custom_call.1} parent=1 // pred_fallthru
      _
    // Predicated region
    $region14: #{tpu_custom_call.1} parent=1 // pred_check
      _
    $region15: #{tpu_custom_call.1} parent=1 // pred_check_branch
      %50 = sbr.rel (0) target = $region17
    $region16: #{tpu_custom_call.1} parent=1 // pred_region
      _
    $region17: #{tpu_custom_call.1} parent=1 // pred_fallthru
      _
    // Predicated region
    $region18: #{tpu_custom_call.1} parent=1 // pred_check
      _
    $region19: #{tpu_custom_call.1} parent=1 // pred_check_branch
      %52 = sbr.rel (0) target = $region21
    $region20: #{tpu_custom_call.1} parent=1 // pred_region
      %s54 = ssub.s32 2048, 2048
      %55 = vsyncadd [#allocation9], %s54
      %s56 = sshll.u32 [#allocation8], 4
      %s57 = int_to_ptr.vmem [resolvable:$true] %s56
      %62 = dma.hbm_to_vmem [thread:$0]  %s4, 2048, %s57, [#allocation9], 128, 128, 8
    $region21: #{tpu_custom_call.1} parent=1 // pred_fallthru
      _
    // Predicated region
    $region22: #{tpu_custom_call.1} parent=1 // pred_check
      _
    $region23: #{tpu_custom_call.1} parent=1 // pred_check_branch
      %64 = sbr.rel (0) target = $region25
    $region24: #{tpu_custom_call.1} parent=1 // pred_region
      _
    $region25: #{tpu_custom_call.1} parent=1 // pred_fallthru
      _
    // Predicated region
    $region26: #{tpu_custom_call.1} parent=1 // pred_check
      _
    $region27: #{tpu_custom_call.1} parent=1 // pred_check_branch
      %66 = sbr.rel (0) target = $region29
    $region28: #{tpu_custom_call.1} parent=1 // pred_region
      %67 = dma.done [#allocation3], 128
    $region29: #{tpu_custom_call.1} parent=1 // pred_fallthru
      _
    // Predicated region
    $region30: #{tpu_custom_call.1} parent=1 // pred_check
      _
    $region31: #{tpu_custom_call.1} parent=1 // pred_check_branch
      %69 = sbr.rel (0) target = $region33
    $region32: #{tpu_custom_call.1} parent=1 // pred_region
      %70 = dma.done [#allocation6], 2048
    $region33: #{tpu_custom_call.1} parent=1 // pred_fallthru
      _
    // Predicated region
    $region34: #{tpu_custom_call.1} parent=1 // pred_check
      _
    $region35: #{tpu_custom_call.1} parent=1 // pred_check_branch
      %72 = sbr.rel (0) target = $region37
    $region36: #{tpu_custom_call.1} parent=1 // pred_region
      %73 = dma.done [#allocation6], 2048
    $region37: #{tpu_custom_call.1} parent=1 // pred_fallthru
      _
    // Predicated region
    $region38: #{tpu_custom_call.1} parent=1 // pred_check
      _
    $region39: #{tpu_custom_call.1} parent=1 // pred_check_branch
      %75 = sbr.rel (0) target = $region41
    $region40: #{tpu_custom_call.1} parent=1 // pred_region
      %76 = dma.done [#allocation9], 2048
    $region41: #{tpu_custom_call.1} parent=1 // pred_fallthru
      _
    %v77 = vld [vmem:[#allocation2] sm:$0xff]
    %v78 = vlaneseq
    %v79 = vand.u32 %v78, 127
    %v80 = vlaneseq
    %v81 = vshrl.u32 %v80, 7
    %v82 = vsub.s32 0, %v81
    %v83 = vrot.slane %v77, %v82
    %85 = vbcast.lane.b32.xlu0 %v83, 256
    %v86 = vpop.permute.xlu0 %85
    %v87 = vlaneseq
    %v88 = vshrl.u32 %v87, 7
    %v89 = vsub.s32 1, %v88
    %v90 = vrot.slane %v77, %v89
    %92 = vbcast.lane.b32.xlu0 %v90, 256
    %v93 = vpop.permute.xlu0 %92
    %v94 = vlaneseq
    %v95 = vshrl.u32 %v94, 7
    %v96 = vsub.s32 2, %v95
    %v97 = vrot.slane %v77, %v96
    %99 = vbcast.lane.b32.xlu0 %v97, 256
    %v100 = vpop.permute.xlu0 %99
    %v101 = vlaneseq
    %v102 = vshrl.u32 %v101, 7
    %v103 = vsub.s32 3, %v102
    %v104 = vrot.slane %v77, %v103
    %106 = vbcast.lane.b32.xlu0 %v104, 256
    %v107 = vpop.permute.xlu0 %106
    %v108 = vlaneseq
    %v109 = vshrl.u32 %v108, 7
    %v110 = vsub.s32 4, %v109
    %v111 = vrot.slane %v77, %v110
    %113 = vbcast.lane.b32.xlu0 %v111, 256
    %v114 = vpop.permute.xlu0 %113
    %v115 = vlaneseq
    %v116 = vshrl.u32 %v115, 7
    %v117 = vsub.s32 5, %v116
    %v118 = vrot.slane %v77, %v117
    %120 = vbcast.lane.b32.xlu0 %v118, 256
    %v121 = vpop.permute.xlu0 %120
    %v122 = vlaneseq
    %v123 = vshrl.u32 %v122, 7
    %v124 = vsub.s32 6, %v123
    %v125 = vrot.slane %v77, %v124
    %127 = vbcast.lane.b32.xlu0 %v125, 256
    %v128 = vpop.permute.xlu0 %127
    %v129 = vlaneseq
    %v130 = vshrl.u32 %v129, 7
    %v131 = vsub.s32 7, %v130
    %v132 = vrot.slane %v77, %v131
    %134 = vbcast.lane.b32.xlu0 %v132, 256
    %v135 = vpop.permute.xlu0 %134
    %vm136 = vcmp.eq.s32.totalorder %v86, %v79
    %vm137 = vcmp.eq.s32.totalorder %v93, %v79
    %vm138 = vcmp.eq.s32.totalorder %v100, %v79
    %vm139 = vcmp.eq.s32.totalorder %v107, %v79
    %vm140 = vcmp.eq.s32.totalorder %v114, %v79
    %vm141 = vcmp.eq.s32.totalorder %v121, %v79
    %vm142 = vcmp.eq.s32.totalorder %v128, %v79
    %vm143 = vcmp.eq.s32.totalorder %v135, %v79
    %v144 = vsel %vm136, 1, 0
    %v145 = vsel %vm137, 1, 0
    %v146 = vsel %vm138, 1, 0
    %v147 = vsel %vm139, 1, 0
    %v148 = vsel %vm140, 1, 0
    %v149 = vsel %vm141, 1, 0
    %v150 = vsel %vm142, 1, 0
    %v151 = vsel %vm143, 1, 0
    %v152 = vcvt.s32.f32 %v144
    %v153 = vcvt.s32.f32 %v145
    %v154 = vcvt.s32.f32 %v146
    %v155 = vcvt.s32.f32 %v147
    %v156 = vcvt.s32.f32 %v148
    %v157 = vcvt.s32.f32 %v149
    %v158 = vcvt.s32.f32 %v150
    %v159 = vcvt.s32.f32 %v151
    %v160 = vrot.slane %v152, 4
    %v161 = vadd.f32 %v152, %v160
    %v162 = vrot.slane %v161, 2
    %v163 = vadd.f32 %v161, %v162
    %v164 = vrot.slane %v163, 1
    %v165 = vadd.f32 %v163, %v164
    %v166 = vrot.slane %v153, 4
    %v167 = vadd.f32 %v153, %v166
    %v168 = vrot.slane %v167, 2
    %v169 = vadd.f32 %v167, %v168
    %v170 = vrot.slane %v169, 1
    %v171 = vadd.f32 %v169, %v170
    %v172 = vrot.slane %v154, 4
    %v173 = vadd.f32 %v154, %v172
    %v174 = vrot.slane %v173, 2
    %v175 = vadd.f32 %v173, %v174
    %v176 = vrot.slane %v175, 1
    %v177 = vadd.f32 %v175, %v176
    %v178 = vrot.slane %v155, 4
    %v179 = vadd.f32 %v155, %v178
    %v180 = vrot.slane %v179, 2
    %v181 = vadd.f32 %v179, %v180
    %v182 = vrot.slane %v181, 1
    %v183 = vadd.f32 %v181, %v182
    %v184 = vrot.slane %v156, 4
    %v185 = vadd.f32 %v156, %v184
    %v186 = vrot.slane %v185, 2
    %v187 = vadd.f32 %v185, %v186
    %v188 = vrot.slane %v187, 1
    %v189 = vadd.f32 %v187, %v188
    %v190 = vrot.slane %v157, 4
    %v191 = vadd.f32 %v157, %v190
    %v192 = vrot.slane %v191, 2
    %v193 = vadd.f32 %v191, %v192
    %v194 = vrot.slane %v193, 1
    %v195 = vadd.f32 %v193, %v194
    %v196 = vrot.slane %v158, 4
    %v197 = vadd.f32 %v158, %v196
    %v198 = vrot.slane %v197, 2
    %v199 = vadd.f32 %v197, %v198
    %v200 = vrot.slane %v199, 1
    %v201 = vadd.f32 %v199, %v200
    %v202 = vrot.slane %v159, 4
    %v203 = vadd.f32 %v159, %v202
    %v204 = vrot.slane %v203, 2
    %v205 = vadd.f32 %v203, %v204
    %v206 = vrot.slane %v205, 1
    %v207 = vadd.f32 %v205, %v206
    %v208 = vld [vmem:[#allocation5] sm:$0xff]
    %v209 = vld [vmem:[#allocation5 + $0x8] sm:$0xff]
    %v210 = vld [vmem:[#allocation5 + $0x10] sm:$0xff]
    %v211 = vld [vmem:[#allocation5 + $0x18] sm:$0xff]
    %v212 = vld [vmem:[#allocation5 + $0x20] sm:$0xff]
    %v213 = vld [vmem:[#allocation5 + $0x28] sm:$0xff]
    %v214 = vld [vmem:[#allocation5 + $0x30] sm:$0xff]
    %v215 = vld [vmem:[#allocation5 + $0x38] sm:$0xff]
    %v216 = vld [vmem:[#allocation5 + $0x40] sm:$0xff]
    %v217 = vld [vmem:[#allocation5 + $0x48] sm:$0xff]
    %v218 = vld [vmem:[#allocation5 + $0x50] sm:$0xff]
    %v219 = vld [vmem:[#allocation5 + $0x58] sm:$0xff]
    %v220 = vld [vmem:[#allocation5 + $0x60] sm:$0xff]
    %v221 = vld [vmem:[#allocation5 + $0x68] sm:$0xff]
    %v222 = vld [vmem:[#allocation5 + $0x70] sm:$0xff]
    %v223 = vld [vmem:[#allocation5 + $0x78] sm:$0xff]
    %vm232 = vcmask 1041409
    %v233 = vsel %vm232, %v171, %v165
    %vm234 = vcmask 1042434
    %v235 = vsel %vm234, %v177, %v233
    %vm236 = vcmask 1043459
    %v237 = vsel %vm236, %v183, %v235
    %vm238 = vcmask 1044484
    %v239 = vsel %vm238, %v189, %v237
    %vm240 = vcmask 1045509
    %v241 = vsel %vm240, %v195, %v239
    %vm242 = vcmask 1046534
    %v243 = vsel %vm242, %v201, %v241
    %vm244 = vcmask 1047559
    %v245 = vsel %vm244, %v207, %v243
    %247 = vmatprep.subr.mxu0 0.0
    %248 = vmatpush1.msra.mxu0 %v223
    %249 = vmatprep.subr.mxu0 0.0
    %250 = vmatpush1.msra.mxu0 %v222
    %251 = vmatprep.subr.mxu0 0.0
    %252 = vmatpush1.msra.mxu0 %v221
    %253 = vmatprep.subr.mxu0 0.0
    %254 = vmatpush1.msra.mxu0 %v220
    %255 = vmatprep.subr.mxu0 0.0
    %256 = vmatpush1.msra.mxu0 %v219
    %257 = vmatprep.subr.mxu0 0.0
    %258 = vmatpush1.msra.mxu0 %v218
    %259 = vmatprep.subr.mxu0 0.0
    %260 = vmatpush1.msra.mxu0 %v217
    %261 = vmatprep.subr.mxu0 0.0
    %262 = vmatpush1.msra.mxu0 %v216
    %263 = vmatprep.subr.mxu0 0.0
    %264 = vmatpush1.msra.mxu0 %v215
    %265 = vmatprep.subr.mxu0 0.0
    %266 = vmatpush1.msra.mxu0 %v214
    %267 = vmatprep.subr.mxu0 0.0
    %268 = vmatpush1.msra.mxu0 %v213
    %269 = vmatprep.subr.mxu0 0.0
    %270 = vmatpush1.msra.mxu0 %v212
    %271 = vmatprep.subr.mxu0 0.0
    %272 = vmatpush1.msra.mxu0 %v211
    %273 = vmatprep.subr.mxu0 0.0
    %274 = vmatpush1.msra.mxu0 %v210
    %275 = vmatprep.subr.mxu0 0.0
    %276 = vmatpush1.msra.mxu0 %v209
    %277 = vmatprep.subr.mxu0 0.0
    %278 = vmatpush1.msra.mxu0 %v208
    %279 = vmatprep.subr.mxu0 0.0
    %280 = vmatpush2.msra.mxu0 0.0
    %281 = vmatprep.subr.mxu0 0.0
    %282 = vmatpush2.msra.mxu0 0.0
    %283 = vmatprep.subr.mxu0 0.0
    %284 = vmatpush2.msra.mxu0 0.0
    %285 = vmatprep.subr.mxu0 0.0
    %286 = vmatpush2.msra.mxu0 0.0
    %287 = vmatprep.subr.mxu0 0.0
    %288 = vmatpush2.msra.mxu0 0.0
    %289 = vmatprep.subr.mxu0 0.0
    %290 = vmatpush2.msra.mxu0 0.0
    %291 = vmatprep.subr.mxu0 0.0
    %292 = vmatpush2.msra.mxu0 0.0
    %293 = vmatprep.subr.mxu0 0.0
    %294 = vmatpush2.msra.mxu0 0.0
    %295 = vmatprep.subr.mxu0 0.0
    %296 = vmatpush2.msra.mxu0 0.0
    %297 = vmatprep.subr.mxu0 0.0
    %298 = vmatpush2.msra.mxu0 0.0
    %299 = vmatprep.subr.mxu0 0.0
    %300 = vmatpush2.msra.mxu0 0.0
    %301 = vmatprep.subr.mxu0 0.0
    %302 = vmatpush2.msra.mxu0 0.0
    %303 = vmatprep.subr.mxu0 0.0
    %304 = vmatpush2.msra.mxu0 0.0
    %305 = vmatprep.subr.mxu0 0.0
    %306 = vmatpush2.msra.mxu0 0.0
    %307 = vmatprep.subr.mxu0 0.0
    %308 = vmatpush2.msra.mxu0 0.0
    %309 = vmatprep.subr.mxu0 0.0
    %310 = vmatpush2.msra.mxu0 0.0
    %311 = vmatprep.mubr.f32.mxu0 0.0
    %312 = vmatmul.mubr.f32.gmra.mxu0 %v245
    %v313 = vpop.f32.mrf.mxu0
    %v314 = vadd.f32 0.0, %v313
    %v315 = vpop.f32.mrf.mxu0
    %316 = vdwg.mxu0
    %v317 = vld [vmem:[#allocation7] sm:$0xff]
    %v318 = vld [vmem:[#allocation7 + $0x8] sm:$0xff]
    %v319 = vld [vmem:[#allocation7 + $0x10] sm:$0xff]
    %v320 = vld [vmem:[#allocation7 + $0x18] sm:$0xff]
    %v321 = vld [vmem:[#allocation7 + $0x20] sm:$0xff]
    %v322 = vld [vmem:[#allocation7 + $0x28] sm:$0xff]
    %v323 = vld [vmem:[#allocation7 + $0x30] sm:$0xff]
    %v324 = vld [vmem:[#allocation7 + $0x38] sm:$0xff]
    %v325 = vld [vmem:[#allocation7 + $0x40] sm:$0xff]
    %v326 = vld [vmem:[#allocation7 + $0x48] sm:$0xff]
    %v327 = vld [vmem:[#allocation7 + $0x50] sm:$0xff]
    %v328 = vld [vmem:[#allocation7 + $0x58] sm:$0xff]
    %v329 = vld [vmem:[#allocation7 + $0x60] sm:$0xff]
    %v330 = vld [vmem:[#allocation7 + $0x68] sm:$0xff]
    %v331 = vld [vmem:[#allocation7 + $0x70] sm:$0xff]
    %v332 = vld [vmem:[#allocation7 + $0x78] sm:$0xff]
    %v333 = vld [vmem:[%s3] sm:$0x1]
    %v335 = vlaneseq
    %v336 = vshrl.u32 %v335, 7
    %v337 = vsub.s32 0, %v336
    %v338 = vrot.slane %v333, %v337
    %340 = vmatprep.subr.mxu0 0.0
    %341 = vmatpush1.msra.mxu0 %v332
    %342 = vmatprep.subr.mxu0 0.0
    %343 = vmatpush1.msra.mxu0 %v331
    %344 = vmatprep.subr.mxu0 0.0
    %345 = vmatpush1.msra.mxu0 %v330
    %346 = vmatprep.subr.mxu0 0.0
    %347 = vmatpush1.msra.mxu0 %v329
    %348 = vmatprep.subr.mxu0 0.0
    %349 = vmatpush1.msra.mxu0 %v328
    %350 = vmatprep.subr.mxu0 0.0
    %351 = vmatpush1.msra.mxu0 %v327
    %352 = vmatprep.subr.mxu0 0.0
    %353 = vmatpush1.msra.mxu0 %v326
    %354 = vmatprep.subr.mxu0 0.0
    %355 = vmatpush1.msra.mxu0 %v325
    %356 = vmatprep.subr.mxu0 0.0
    %357 = vmatpush1.msra.mxu0 %v324
    %358 = vmatprep.subr.mxu0 0.0
    %359 = vmatpush1.msra.mxu0 %v323
    %360 = vmatprep.subr.mxu0 0.0
    %361 = vmatpush1.msra.mxu0 %v322
    %362 = vmatprep.subr.mxu0 0.0
    %363 = vmatpush1.msra.mxu0 %v321
    %364 = vmatprep.subr.mxu0 0.0
    %365 = vmatpush1.msra.mxu0 %v320
    %366 = vmatprep.subr.mxu0 0.0
    %367 = vmatpush1.msra.mxu0 %v319
    %368 = vmatprep.subr.mxu0 0.0
    %369 = vmatpush1.msra.mxu0 %v318
    %370 = vmatprep.subr.mxu0 0.0
    %371 = vmatpush1.msra.mxu0 %v317
    %372 = vmatprep.subr.mxu0 0.0
    %373 = vmatpush2.msra.mxu0 0.0
    %374 = vmatprep.subr.mxu0 0.0
    %375 = vmatpush2.msra.mxu0 0.0
    %376 = vmatprep.subr.mxu0 0.0
    %377 = vmatpush2.msra.mxu0 0.0
    %378 = vmatprep.subr.mxu0 0.0
    %379 = vmatpush2.msra.mxu0 0.0
    %380 = vmatprep.subr.mxu0 0.0
    %381 = vmatpush2.msra.mxu0 0.0
    %382 = vmatprep.subr.mxu0 0.0
    %383 = vmatpush2.msra.mxu0 0.0
    %384 = vmatprep.subr.mxu0 0.0
    %385 = vmatpush2.msra.mxu0 0.0
    %386 = vmatprep.subr.mxu0 0.0
    %387 = vmatpush2.msra.mxu0 0.0
    %388 = vmatprep.subr.mxu0 0.0
    %389 = vmatpush2.msra.mxu0 0.0
    %390 = vmatprep.subr.mxu0 0.0
    %391 = vmatpush2.msra.mxu0 0.0
    %392 = vmatprep.subr.mxu0 0.0
    %393 = vmatpush2.msra.mxu0 0.0
    %394 = vmatprep.subr.mxu0 0.0
    %395 = vmatpush2.msra.mxu0 0.0
    %396 = vmatprep.subr.mxu0 0.0
    %397 = vmatpush2.msra.mxu0 0.0
    %398 = vmatprep.subr.mxu0 0.0
    %399 = vmatpush2.msra.mxu0 0.0
    %400 = vmatprep.subr.mxu0 0.0
    %401 = vmatpush2.msra.mxu0 0.0
    %402 = vmatprep.subr.mxu0 0.0
    %403 = vmatpush2.msra.mxu0 0.0
    %404 = vmatprep.mubr.f32.mxu0 0.0
    %405 = vmatmul.mubr.f32.gmra.mxu0 %v314
    %v406 = vpop.f32.mrf.mxu0
    %v407 = vadd.f32 %v338, %v406
    %v408 = vpop.f32.mrf.mxu0
    %409 = vdwg.mxu0
    %v410 = vmax.f32 %v407, 0.0
    %v411 = vld [vmem:[#allocation8] sm:$0xff]
    %v412 = vld [vmem:[#allocation8 + $0x8] sm:$0xff]
    %v413 = vld [vmem:[#allocation8 + $0x10] sm:$0xff]
    %v414 = vld [vmem:[#allocation8 + $0x18] sm:$0xff]
    %v415 = vld [vmem:[#allocation8 + $0x20] sm:$0xff]
    %v416 = vld [vmem:[#allocation8 + $0x28] sm:$0xff]
    %v417 = vld [vmem:[#allocation8 + $0x30] sm:$0xff]
    %v418 = vld [vmem:[#allocation8 + $0x38] sm:$0xff]
    %v419 = vld [vmem:[#allocation8 + $0x40] sm:$0xff]
    %v420 = vld [vmem:[#allocation8 + $0x48] sm:$0xff]
    %v421 = vld [vmem:[#allocation8 + $0x50] sm:$0xff]
    %v422 = vld [vmem:[#allocation8 + $0x58] sm:$0xff]
    %v423 = vld [vmem:[#allocation8 + $0x60] sm:$0xff]
    %v424 = vld [vmem:[#allocation8 + $0x68] sm:$0xff]
    %v425 = vld [vmem:[#allocation8 + $0x70] sm:$0xff]
    %v426 = vld [vmem:[#allocation8 + $0x78] sm:$0xff]
    %v427 = vld [vmem:[%s5] sm:$0x1]
    %v429 = vlaneseq
    %v430 = vshrl.u32 %v429, 7
    %v431 = vsub.s32 0, %v430
    %v432 = vrot.slane %v427, %v431
    %434 = vmatprep.subr.mxu0 0.0
    %435 = vmatpush1.msra.mxu0 %v426
    %436 = vmatprep.subr.mxu0 0.0
    %437 = vmatpush1.msra.mxu0 %v425
    %438 = vmatprep.subr.mxu0 0.0
    %439 = vmatpush1.msra.mxu0 %v424
    %440 = vmatprep.subr.mxu0 0.0
    %441 = vmatpush1.msra.mxu0 %v423
    %442 = vmatprep.subr.mxu0 0.0
    %443 = vmatpush1.msra.mxu0 %v422
    %444 = vmatprep.subr.mxu0 0.0
    %445 = vmatpush1.msra.mxu0 %v421
    %446 = vmatprep.subr.mxu0 0.0
    %447 = vmatpush1.msra.mxu0 %v420
    %448 = vmatprep.subr.mxu0 0.0
    %449 = vmatpush1.msra.mxu0 %v419
    %450 = vmatprep.subr.mxu0 0.0
    %451 = vmatpush1.msra.mxu0 %v418
    %452 = vmatprep.subr.mxu0 0.0
    %453 = vmatpush1.msra.mxu0 %v417
    %454 = vmatprep.subr.mxu0 0.0
    %455 = vmatpush1.msra.mxu0 %v416
    %456 = vmatprep.subr.mxu0 0.0
    %457 = vmatpush1.msra.mxu0 %v415
    %458 = vmatprep.subr.mxu0 0.0
    %459 = vmatpush1.msra.mxu0 %v414
    %460 = vmatprep.subr.mxu0 0.0
    %461 = vmatpush1.msra.mxu0 %v413
    %462 = vmatprep.subr.mxu0 0.0
    %463 = vmatpush1.msra.mxu0 %v412
    %464 = vmatprep.subr.mxu0 0.0
    %465 = vmatpush1.msra.mxu0 %v411
    %466 = vmatprep.subr.mxu0 0.0
    %467 = vmatpush2.msra.mxu0 0.0
    %468 = vmatprep.subr.mxu0 0.0
    %469 = vmatpush2.msra.mxu0 0.0
    %470 = vmatprep.subr.mxu0 0.0
    %471 = vmatpush2.msra.mxu0 0.0
    %472 = vmatprep.subr.mxu0 0.0
    %473 = vmatpush2.msra.mxu0 0.0
    %474 = vmatprep.subr.mxu0 0.0
    %475 = vmatpush2.msra.mxu0 0.0
    %476 = vmatprep.subr.mxu0 0.0
    %477 = vmatpush2.msra.mxu0 0.0
    %478 = vmatprep.subr.mxu0 0.0
    %479 = vmatpush2.msra.mxu0 0.0
    %480 = vmatprep.subr.mxu0 0.0
    %481 = vmatpush2.msra.mxu0 0.0
    %482 = vmatprep.subr.mxu0 0.0
    %483 = vmatpush2.msra.mxu0 0.0
    %484 = vmatprep.subr.mxu0 0.0
    %485 = vmatpush2.msra.mxu0 0.0
    %486 = vmatprep.subr.mxu0 0.0
    %487 = vmatpush2.msra.mxu0 0.0
    %488 = vmatprep.subr.mxu0 0.0
    %489 = vmatpush2.msra.mxu0 0.0
    %490 = vmatprep.subr.mxu0 0.0
    %491 = vmatpush2.msra.mxu0 0.0
    %492 = vmatprep.subr.mxu0 0.0
    %493 = vmatpush2.msra.mxu0 0.0
    %494 = vmatprep.subr.mxu0 0.0
    %495 = vmatpush2.msra.mxu0 0.0
    %496 = vmatprep.subr.mxu0 0.0
    %497 = vmatpush2.msra.mxu0 0.0
    %498 = vmatprep.mubr.f32.mxu0 0.0
    %499 = vmatmul.mubr.f32.gmra.mxu0 %v410
    %v500 = vpop.f32.mrf.mxu0
    %v501 = vadd.f32 %v432, %v500
    %v502 = vpop.f32.mrf.mxu0
    %503 = vdwg.mxu0
    %504 = vst [vmem:[#allocation10] sm:$0xff] %v501
    // Predicated region
    $region42: #{tpu_custom_call.1} parent=1 // pred_check
      _
    $region43: #{tpu_custom_call.1} parent=1 // pred_check_branch
      %506 = sbr.rel (0) target = $region45
    $region44: #{tpu_custom_call.1} parent=1 // pred_region
      %s508 = ssub.s32 128, 128
      %509 = vsyncadd [#allocation4], %s508
      %s511 = sshll.u32 [#allocation10], 4
      %s512 = int_to_ptr.vmem [resolvable:$true] %s511
      %514 = dma.vmem_to_hbm [thread:$0]  %s512, 128, %s6, [#allocation4]
    $region45: #{tpu_custom_call.1} parent=1 // pred_fallthru
      _
    // Predicated region
    $region46: #{tpu_custom_call.1} parent=1 // pred_check
      _
    $region47: #{tpu_custom_call.1} parent=1 // pred_check_branch
      %516 = sbr.rel (0) target = $region49
    $region48: #{tpu_custom_call.1} parent=1 // pred_region
      %517 = dma.done [#allocation4], 128
    $region49: #{tpu_custom_call.1} parent=1 // pred_fallthru
      _
    %518 = vsyncpa [#allocation3], 1
    %519 = vsyncpa [#allocation6], 1
    %520 = vsyncpa [#allocation9], 1
    %521 = vsyncpa [#allocation4], 1

</llo_original>
